<compile_context>
chip_gen: v7x
topology: tpu7x:2x2x1
jax: 0.10.0
libtpu: 0.0.40
codegen_flags: <defaults>
</compile_context>

<pallas_src>
import functools

import jax
import jax.numpy as jnp
from jax.experimental import pallas as pl
from jax.experimental.pallas import tpu as pltpu


def _char_lstm_kernel(xg_ref, h0_ref, c0_ref, whh_ref, wfc_ref, bfc_ref,
                      out_ref, hn_ref, cn_ref, hseq_sc,
                      *, hidden_size, batch, seq_len):
    """Whole-sequence LSTM recurrence + FC in one invocation (no grid)."""
    H, B, T = hidden_size, batch, seq_len

    # Loop-invariant loads hoisted out of the recurrence.
    w_hh = whh_ref[...]                                   # (H, 4H) bf16

    # Lane mask selecting the "g" (cell candidate) gate columns [2H, 3H).
    lane = jax.lax.broadcasted_iota(jnp.int32, (B, 4 * H), 1)
    is_g = jnp.logical_and(lane >= 2 * H, lane < 3 * H)

    h = h0_ref[0]                                         # (B, H) f32
    c = c0_ref[0]                                         # (B, H) f32

    # Statically-unrolled time recurrence (T small & static).  The serial
    # chain per step is: one bf16 MXU pass (h @ W_hh), one VPU add, one EUP
    # tanh over the (B, 4H) gate block, elementwise state update, one EUP
    # tanh over (B, H).
    for t in range(T):
        hh = jnp.dot(h.astype(jnp.bfloat16), w_hh,
                     preferred_element_type=jnp.float32)  # (B, 4H) f32
        # xg_ref[t] already holds x_t @ W_ih + b_ih + b_hh (folded in wrapper).
        gates = xg_ref[t] + hh                            # (B, 4H) f32

        # Single transcendental pass: sigmoid(x) = 0.5 * tanh(0.5*x) + 0.5.
        z = jnp.where(is_g, gates, 0.5 * gates)
        tz = jnp.tanh(z)
        act = jnp.where(is_g, tz, 0.5 * tz + 0.5)

        i_g = act[:, 0 * H:1 * H]
        f_g = act[:, 1 * H:2 * H]
        g_g = act[:, 2 * H:3 * H]
        o_g = act[:, 3 * H:4 * H]
        c = f_g * c + i_g * g_g
        h = o_g * jnp.tanh(c)

        # Record h_t (time-major, contiguous rows). Static slice; only the
        # final FC depends on it, so it sits off the serial chain.
        hseq_sc[t * B:(t + 1) * B, :] = h

    # Final hidden / cell state written exactly once.
    hn_ref[0] = h
    cn_ref[0] = c

    # FC epilogue: ONE (T*B, H) @ (H, O_pad) bf16 matmul, lane-dense
    # (O padded to a multiple of 128 in the wrapper) full-width store.
    h_all = hseq_sc[...].astype(jnp.bfloat16)             # (T*B, H)
    out_ref[...] = (jnp.dot(h_all, wfc_ref[...],
                            preferred_element_type=jnp.float32)
                    + bfc_ref[...])


@jax.jit
def char_lstm_forward(params, input_ids, hidden):
    """Mirror of CharLSTM.forward.

    input_ids: int32 (B, T)
    hidden:    tuple (h0, c0), each float32 (n_layers=1, B, H)
    returns:   (logits (B*T, O), (h_n (1, B, H), c_n (1, B, H)))
    """
    emb_table = params["embedding"]            # (vocab, H)
    w_ih = params["w_ih"]                      # (H, 4H)  pre-transposed
    w_hh = params["w_hh"]                      # (H, 4H)  pre-transposed
    b_gates = params["b_gates"]                # (1, 4H)  = b_ih + b_hh
    w_fc = params["w_fc"]                      # (H, O)   pre-transposed
    b_fc = params["b_fc"]                      # (1, O)

    B, T = input_ids.shape
    H = emb_table.shape[1]
    O = w_fc.shape[1]
    O_pad = max(128, ((O + 127) // 128) * 128)

    # Fold the x-side projection AND both gate biases into the embedding
    # table, so the kernel's per-step work is only the h @ W_hh recurrence.
    emb_gates = emb_table @ w_ih + b_gates                 # (vocab, 4H) f32
    # Embedding gather (data-dependent) stays in XLA glue, time-major layout.
    xg_tb = jnp.take(emb_gates, input_ids.T, axis=0)       # (T, B, 4H) f32

    # Lane-dense padded FC weights; bf16 MXU operands (f32 accumulation).
    w_fc_pad = jnp.zeros((H, O_pad), jnp.float32).at[:, :O].set(w_fc)
    b_fc_pad = jnp.zeros((1, O_pad), jnp.float32).at[:, :O].set(b_fc)

    h0, c0 = hidden                                        # each (1, B, H)

    # Guard the "everything resident in VMEM, no grid" assumption (v7x has
    # only 32 MiB scoped / 64 MiB physical VMEM — half of v5e/v6e).
    resident_bytes = (4 * xg_tb.size + 4 * (h0.size + c0.size)
                      + 2 * (w_hh.size + w_fc_pad.size) + 4 * b_fc_pad.size
                      + 4 * T * B * O_pad + 4 * T * B * H)
    assert resident_bytes < 24 * 1024 * 1024, (
        "Working set too large for the no-grid resident design; add batch "
        "tiling (grid over B) before scaling up.")

    kernel = functools.partial(_char_lstm_kernel,
                               hidden_size=H, batch=B, seq_len=T)

    logits_tm, h_n, c_n = pl.pallas_call(
        kernel,
        out_shape=(
            jax.ShapeDtypeStruct((T * B, O_pad), jnp.float32),
            jax.ShapeDtypeStruct((1, B, H), jnp.float32),
            jax.ShapeDtypeStruct((1, B, H), jnp.float32),
        ),
        scratch_shapes=[pltpu.VMEM((T * B, H), jnp.float32)],   # h_t history
        compiler_params=pltpu.CompilerParams(
            vmem_limit_bytes=32 * 1024 * 1024),
    )(xg_tb, h0, c0,
      w_hh.astype(jnp.bfloat16),
      w_fc_pad.astype(jnp.bfloat16),
      b_fc_pad)

    # Time-major -> PyTorch batch-major (row b*T + t) order; drop lane pad.
    logits = (logits_tm.reshape(T, B, O_pad)
              .transpose(1, 0, 2)
              .reshape(B * T, O_pad)[:, :O])
    return logits, (h_n, c_n)


def _reference_forward(params, input_ids, hidden):
    """Pure-JAX f32 reference (same math) for a correctness check."""
    emb = params["embedding"][input_ids]               # (B, T, H)
    h = hidden[0][0]
    c = hidden[1][0]
    H = h.shape[-1]
    outs = []
    for t in range(emb.shape[1]):
        x_t = emb[:, t, :]
        gates = x_t @ params["w_ih"] + h @ params["w_hh"] + params["b_gates"]
        i = jax.nn.sigmoid(gates[:, 0 * H:1 * H])
        f = jax.nn.sigmoid(gates[:, 1 * H:2 * H])
        g = jnp.tanh(gates[:, 2 * H:3 * H])
        o = jax.nn.sigmoid(gates[:, 3 * H:4 * H])
        c = f * c + i * g
        h = o * jnp.tanh(c)
        outs.append(h)
    out = jnp.stack(outs, axis=1)                      # (B, T, H)
    B, T, _ = out.shape
    logits = out.reshape(B * T, H) @ params["w_fc"] + params["b_fc"]
    return logits, (h[None], c[None])


def init_params(key, input_size, hidden_size, output_size):
    ks = jax.random.split(key, 7)
    scale = 0.1
    H = hidden_size
    return {
        "embedding": scale * jax.random.normal(ks[0], (input_size, H), jnp.float32),
        # Stored pre-transposed relative to PyTorch ((4H,H) -> (H,4H)).
        "w_ih": scale * jax.random.normal(ks[1], (H, 4 * H), jnp.float32),
        "w_hh": scale * jax.random.normal(ks[2], (H, 4 * H), jnp.float32),
        # Combined bias = b_ih + b_hh.
        "b_gates": scale * jax.random.normal(ks[3], (1, 4 * H), jnp.float32),
        "w_fc": scale * jax.random.normal(ks[4], (H, output_size), jnp.float32),
        "b_fc": scale * jax.random.normal(ks[5], (1, output_size), jnp.float32),
    }


if __name__ == "__main__":
    input_size = 64     # vocab size for the embedding
    hidden_size = 32
    output_size = 64
    n_layers = 1
    B, T = 2, 8

    key = jax.random.PRNGKey(0)
    pkey, ikey = jax.random.split(key)
    params = init_params(pkey, input_size, hidden_size, output_size)

    input_ids = jax.random.randint(ikey, (B, T), 0, input_size, dtype=jnp.int32)
    hidden = (jnp.zeros((n_layers, B, hidden_size), jnp.float32),
              jnp.zeros((n_layers, B, hidden_size), jnp.float32))

    logits, (h_n, c_n) = char_lstm_forward(params, input_ids, hidden)
    jax.block_until_ready((logits, h_n, c_n))

    ref_logits, (ref_h, ref_c) = _reference_forward(params, input_ids, hidden)
    assert logits.shape == (B * T, output_size)
    assert h_n.shape == (n_layers, B, hidden_size)
    assert c_n.shape == (n_layers, B, hidden_size)
    # bf16 MXU operands (f32 accumulation) -> looser tolerance than pure f32.
    assert jnp.allclose(logits, ref_logits, atol=2e-2, rtol=2e-2)
    assert jnp.allclose(h_n, ref_h, atol=2e-2, rtol=2e-2)
    assert jnp.allclose(c_n, ref_c, atol=2e-2, rtol=2e-2)

    print("KERNEL_OK")
</pallas_src>

<mosaic_0001>
module attributes {stable_mosaic.version = 11 : i64} {
  func.func @_char_lstm_kernel(%arg0: memref<8x2x128xf32, #tpu.memory_space<vmem>>, %arg1: memref<1x2x32xf32, #tpu.memory_space<vmem>>, %arg2: memref<1x2x32xf32, #tpu.memory_space<vmem>>, %arg3: memref<32x128xbf16, #tpu.memory_space<vmem>>, %arg4: memref<32x128xbf16, #tpu.memory_space<vmem>>, %arg5: memref<1x128xf32, #tpu.memory_space<vmem>>, %arg6: memref<16x128xf32, #tpu.memory_space<vmem>>, %arg7: memref<1x2x32xf32, #tpu.memory_space<vmem>>, %arg8: memref<1x2x32xf32, #tpu.memory_space<vmem>>, %arg9: memref<16x32xf32, #tpu.memory_space<vmem>>) attributes {dimension_semantics = [], scalar_prefetch = 0 : i64, scratch_operands = 1 : i64, tpu.core_type = #tpu.core_type<tc>} {
    %c0 = arith.constant 0 : index
    %c0_0 = arith.constant 0 : index
    %0 = vector.load %arg3[%c0, %c0_0] : memref<32x128xbf16, #tpu.memory_space<vmem>>, vector<32x128xbf16>
    %1 = tpu.iota {dimensions = array<i32: 1>} : vector<2x128xi32>
    %c64_i32 = arith.constant 64 : i32
    %2 = vector.broadcast %c64_i32 : i32 to vector<2x128xi32>
    %3 = arith.cmpi sge, %1, %2 : vector<2x128xi32>
    %c96_i32 = arith.constant 96 : i32
    %4 = vector.broadcast %c96_i32 : i32 to vector<2x128xi32>
    %5 = arith.cmpi slt, %1, %4 : vector<2x128xi32>
    %6 = arith.andi %3, %5 : vector<2x128xi1>
    %c0_1 = arith.constant 0 : index
    %c0_2 = arith.constant 0 : index
    %c0_3 = arith.constant 0 : index
    %7 = vector.load %arg1[%c0_1, %c0_2, %c0_3] : memref<1x2x32xf32, #tpu.memory_space<vmem>>, vector<1x2x32xf32>
    %8 = vector.shape_cast %7 : vector<1x2x32xf32> to vector<2x32xf32>
    %c0_4 = arith.constant 0 : index
    %c0_5 = arith.constant 0 : index
    %c0_6 = arith.constant 0 : index
    %9 = vector.load %arg2[%c0_4, %c0_5, %c0_6] : memref<1x2x32xf32, #tpu.memory_space<vmem>>, vector<1x2x32xf32>
    %10 = vector.shape_cast %9 : vector<1x2x32xf32> to vector<2x32xf32>
    %11 = arith.truncf %8 : vector<2x32xf32> to vector<2x32xbf16>
    %cst = arith.constant dense<0.000000e+00> : vector<2x128xf32>
    %12 = tpu.matmul %11, %0, %cst {dimension_numbers = #tpu.dot_dimension_numbers<[1], [0], [0], [1], [0, 0, 1, 1], [], []>} : vector<2x32xbf16>, vector<32x128xbf16>, vector<2x128xf32> -> vector<2x128xf32>
    %c0_7 = arith.constant 0 : index
    %c0_8 = arith.constant 0 : index
    %c0_9 = arith.constant 0 : index
    %13 = vector.load %arg0[%c0_7, %c0_8, %c0_9] : memref<8x2x128xf32, #tpu.memory_space<vmem>>, vector<1x2x128xf32>
    %14 = vector.shape_cast %13 : vector<1x2x128xf32> to vector<2x128xf32>
    %15 = arith.addf %14, %12 : vector<2x128xf32>
    %cst_10 = arith.constant 5.000000e-01 : f32
    %16 = vector.broadcast %cst_10 : f32 to vector<2x128xf32>
    %17 = arith.mulf %16, %15 : vector<2x128xf32>
    %18 = arith.select %6, %15, %17 : vector<2x128xi1>, vector<2x128xf32>
    %19 = math.tanh %18 : vector<2x128xf32>
    %cst_11 = arith.constant 5.000000e-01 : f32
    %20 = vector.broadcast %cst_11 : f32 to vector<2x128xf32>
    %21 = arith.mulf %20, %19 : vector<2x128xf32>
    %cst_12 = arith.constant 5.000000e-01 : f32
    %22 = vector.broadcast %cst_12 : f32 to vector<2x128xf32>
    %23 = arith.addf %21, %22 : vector<2x128xf32>
    %24 = arith.select %6, %19, %23 : vector<2x128xi1>, vector<2x128xf32>
    %25 = vector.extract_strided_slice %24 {offsets = [0, 0], sizes = [2, 32], strides = [1, 1]} : vector<2x128xf32> to vector<2x32xf32>
    %26 = vector.extract_strided_slice %24 {offsets = [0, 32], sizes = [2, 32], strides = [1, 1]} : vector<2x128xf32> to vector<2x32xf32>
    %27 = vector.extract_strided_slice %24 {offsets = [0, 64], sizes = [2, 32], strides = [1, 1]} : vector<2x128xf32> to vector<2x32xf32>
    %28 = vector.extract_strided_slice %24 {offsets = [0, 96], sizes = [2, 32], strides = [1, 1]} : vector<2x128xf32> to vector<2x32xf32>
    %29 = arith.mulf %26, %10 : vector<2x32xf32>
    %30 = arith.mulf %25, %27 : vector<2x32xf32>
    %31 = arith.addf %29, %30 : vector<2x32xf32>
    %32 = math.tanh %31 : vector<2x32xf32>
    %33 = arith.mulf %28, %32 : vector<2x32xf32>
    %c0_13 = arith.constant 0 : index
    %c0_14 = arith.constant 0 : index
    %34 = vector.load %arg9[%c0_13, %c0_14] : memref<16x32xf32, #tpu.memory_space<vmem>>, vector<2x32xf32>
    tpu.vector_store %arg9[%c0_13, %c0_14], %33 {strides = array<i32>} : memref<16x32xf32, #tpu.memory_space<vmem>>, vector<2x32xf32>,
    %35 = arith.truncf %33 : vector<2x32xf32> to vector<2x32xbf16>
    %cst_15 = arith.constant dense<0.000000e+00> : vector<2x128xf32>
    %36 = tpu.matmul %35, %0, %cst_15 {dimension_numbers = #tpu.dot_dimension_numbers<[1], [0], [0], [1], [0, 0, 1, 1], [], []>} : vector<2x32xbf16>, vector<32x128xbf16>, vector<2x128xf32> -> vector<2x128xf32>
    %c1 = arith.constant 1 : index
    %c0_16 = arith.constant 0 : index
    %c0_17 = arith.constant 0 : index
    %37 = vector.load %arg0[%c1, %c0_16, %c0_17] : memref<8x2x128xf32, #tpu.memory_space<vmem>>, vector<1x2x128xf32>
    %38 = vector.shape_cast %37 : vector<1x2x128xf32> to vector<2x128xf32>
    %39 = arith.addf %38, %36 : vector<2x128xf32>
    %cst_18 = arith.constant 5.000000e-01 : f32
    %40 = vector.broadcast %cst_18 : f32 to vector<2x128xf32>
    %41 = arith.mulf %40, %39 : vector<2x128xf32>
    %42 = arith.select %6, %39, %41 : vector<2x128xi1>, vector<2x128xf32>
    %43 = math.tanh %42 : vector<2x128xf32>
    %cst_19 = arith.constant 5.000000e-01 : f32
    %44 = vector.broadcast %cst_19 : f32 to vector<2x128xf32>
    %45 = arith.mulf %44, %43 : vector<2x128xf32>
    %cst_20 = arith.constant 5.000000e-01 : f32
    %46 = vector.broadcast %cst_20 : f32 to vector<2x128xf32>
    %47 = arith.addf %45, %46 : vector<2x128xf32>
    %48 = arith.select %6, %43, %47 : vector<2x128xi1>, vector<2x128xf32>
    %49 = vector.extract_strided_slice %48 {offsets = [0, 0], sizes = [2, 32], strides = [1, 1]} : vector<2x128xf32> to vector<2x32xf32>
    %50 = vector.extract_strided_slice %48 {offsets = [0, 32], sizes = [2, 32], strides = [1, 1]} : vector<2x128xf32> to vector<2x32xf32>
    %51 = vector.extract_strided_slice %48 {offsets = [0, 64], sizes = [2, 32], strides = [1, 1]} : vector<2x128xf32> to vector<2x32xf32>
    %52 = vector.extract_strided_slice %48 {offsets = [0, 96], sizes = [2, 32], strides = [1, 1]} : vector<2x128xf32> to vector<2x32xf32>
    %53 = arith.mulf %50, %31 : vector<2x32xf32>
    %54 = arith.mulf %49, %51 : vector<2x32xf32>
    %55 = arith.addf %53, %54 : vector<2x32xf32>
    %56 = math.tanh %55 : vector<2x32xf32>
    %57 = arith.mulf %52, %56 : vector<2x32xf32>
    %c2 = arith.constant 2 : index
    %c0_21 = arith.constant 0 : index
    %58 = vector.load %arg9[%c2, %c0_21] : memref<16x32xf32, #tpu.memory_space<vmem>>, vector<2x32xf32>
    tpu.vector_store %arg9[%c2, %c0_21], %57 {strides = array<i32>} : memref<16x32xf32, #tpu.memory_space<vmem>>, vector<2x32xf32>,
    %59 = arith.truncf %57 : vector<2x32xf32> to vector<2x32xbf16>
    %cst_22 = arith.constant dense<0.000000e+00> : vector<2x128xf32>
    %60 = tpu.matmul %59, %0, %cst_22 {dimension_numbers = #tpu.dot_dimension_numbers<[1], [0], [0], [1], [0, 0, 1, 1], [], []>} : vector<2x32xbf16>, vector<32x128xbf16>, vector<2x128xf32> -> vector<2x128xf32>
    %c2_23 = arith.constant 2 : index
    %c0_24 = arith.constant 0 : index
    %c0_25 = arith.constant 0 : index
    %61 = vector.load %arg0[%c2_23, %c0_24, %c0_25] : memref<8x2x128xf32, #tpu.memory_space<vmem>>, vector<1x2x128xf32>
    %62 = vector.shape_cast %61 : vector<1x2x128xf32> to vector<2x128xf32>
    %63 = arith.addf %62, %60 : vector<2x128xf32>
    %cst_26 = arith.constant 5.000000e-01 : f32
    %64 = vector.broadcast %cst_26 : f32 to vector<2x128xf32>
    %65 = arith.mulf %64, %63 : vector<2x128xf32>
    %66 = arith.select %6, %63, %65 : vector<2x128xi1>, vector<2x128xf32>
    %67 = math.tanh %66 : vector<2x128xf32>
    %cst_27 = arith.constant 5.000000e-01 : f32
    %68 = vector.broadcast %cst_27 : f32 to vector<2x128xf32>
    %69 = arith.mulf %68, %67 : vector<2x128xf32>
    %cst_28 = arith.constant 5.000000e-01 : f32
    %70 = vector.broadcast %cst_28 : f32 to vector<2x128xf32>
    %71 = arith.addf %69, %70 : vector<2x128xf32>
    %72 = arith.select %6, %67, %71 : vector<2x128xi1>, vector<2x128xf32>
    %73 = vector.extract_strided_slice %72 {offsets = [0, 0], sizes = [2, 32], strides = [1, 1]} : vector<2x128xf32> to vector<2x32xf32>
    %74 = vector.extract_strided_slice %72 {offsets = [0, 32], sizes = [2, 32], strides = [1, 1]} : vector<2x128xf32> to vector<2x32xf32>
    %75 = vector.extract_strided_slice %72 {offsets = [0, 64], sizes = [2, 32], strides = [1, 1]} : vector<2x128xf32> to vector<2x32xf32>
    %76 = vector.extract_strided_slice %72 {offsets = [0, 96], sizes = [2, 32], strides = [1, 1]} : vector<2x128xf32> to vector<2x32xf32>
    %77 = arith.mulf %74, %55 : vector<2x32xf32>
    %78 = arith.mulf %73, %75 : vector<2x32xf32>
    %79 = arith.addf %77, %78 : vector<2x32xf32>
    %80 = math.tanh %79 : vector<2x32xf32>
    %81 = arith.mulf %76, %80 : vector<2x32xf32>
    %c4 = arith.constant 4 : index
    %c0_29 = arith.constant 0 : index
    %82 = vector.load %arg9[%c4, %c0_29] : memref<16x32xf32, #tpu.memory_space<vmem>>, vector<2x32xf32>
    tpu.vector_store %arg9[%c4, %c0_29], %81 {strides = array<i32>} : memref<16x32xf32, #tpu.memory_space<vmem>>, vector<2x32xf32>,
    %83 = arith.truncf %81 : vector<2x32xf32> to vector<2x32xbf16>
    %cst_30 = arith.constant dense<0.000000e+00> : vector<2x128xf32>
    %84 = tpu.matmul %83, %0, %cst_30 {dimension_numbers = #tpu.dot_dimension_numbers<[1], [0], [0], [1], [0, 0, 1, 1], [], []>} : vector<2x32xbf16>, vector<32x128xbf16>, vector<2x128xf32> -> vector<2x128xf32>
    %c3 = arith.constant 3 : index
    %c0_31 = arith.constant 0 : index
    %c0_32 = arith.constant 0 : index
    %85 = vector.load %arg0[%c3, %c0_31, %c0_32] : memref<8x2x128xf32, #tpu.memory_space<vmem>>, vector<1x2x128xf32>
    %86 = vector.shape_cast %85 : vector<1x2x128xf32> to vector<2x128xf32>
    %87 = arith.addf %86, %84 : vector<2x128xf32>
    %cst_33 = arith.constant 5.000000e-01 : f32
    %88 = vector.broadcast %cst_33 : f32 to vector<2x128xf32>
    %89 = arith.mulf %88, %87 : vector<2x128xf32>
    %90 = arith.select %6, %87, %89 : vector<2x128xi1>, vector<2x128xf32>
    %91 = math.tanh %90 : vector<2x128xf32>
    %cst_34 = arith.constant 5.000000e-01 : f32
    %92 = vector.broadcast %cst_34 : f32 to vector<2x128xf32>
    %93 = arith.mulf %92, %91 : vector<2x128xf32>
    %cst_35 = arith.constant 5.000000e-01 : f32
    %94 = vector.broadcast %cst_35 : f32 to vector<2x128xf32>
    %95 = arith.addf %93, %94 : vector<2x128xf32>
    %96 = arith.select %6, %91, %95 : vector<2x128xi1>, vector<2x128xf32>
    %97 = vector.extract_strided_slice %96 {offsets = [0, 0], sizes = [2, 32], strides = [1, 1]} : vector<2x128xf32> to vector<2x32xf32>
    %98 = vector.extract_strided_slice %96 {offsets = [0, 32], sizes = [2, 32], strides = [1, 1]} : vector<2x128xf32> to vector<2x32xf32>
    %99 = vector.extract_strided_slice %96 {offsets = [0, 64], sizes = [2, 32], strides = [1, 1]} : vector<2x128xf32> to vector<2x32xf32>
    %100 = vector.extract_strided_slice %96 {offsets = [0, 96], sizes = [2, 32], strides = [1, 1]} : vector<2x128xf32> to vector<2x32xf32>
    %101 = arith.mulf %98, %79 : vector<2x32xf32>
    %102 = arith.mulf %97, %99 : vector<2x32xf32>
    %103 = arith.addf %101, %102 : vector<2x32xf32>
    %104 = math.tanh %103 : vector<2x32xf32>
    %105 = arith.mulf %100, %104 : vector<2x32xf32>
    %c6 = arith.constant 6 : index
    %c0_36 = arith.constant 0 : index
    %106 = vector.load %arg9[%c6, %c0_36] : memref<16x32xf32, #tpu.memory_space<vmem>>, vector<2x32xf32>
    tpu.vector_store %arg9[%c6, %c0_36], %105 {strides = array<i32>} : memref<16x32xf32, #tpu.memory_space<vmem>>, vector<2x32xf32>,
    %107 = arith.truncf %105 : vector<2x32xf32> to vector<2x32xbf16>
    %cst_37 = arith.constant dense<0.000000e+00> : vector<2x128xf32>
    %108 = tpu.matmul %107, %0, %cst_37 {dimension_numbers = #tpu.dot_dimension_numbers<[1], [0], [0], [1], [0, 0, 1, 1], [], []>} : vector<2x32xbf16>, vector<32x128xbf16>, vector<2x128xf32> -> vector<2x128xf32>
    %c4_38 = arith.constant 4 : index
    %c0_39 = arith.constant 0 : index
    %c0_40 = arith.constant 0 : index
    %109 = vector.load %arg0[%c4_38, %c0_39, %c0_40] : memref<8x2x128xf32, #tpu.memory_space<vmem>>, vector<1x2x128xf32>
    %110 = vector.shape_cast %109 : vector<1x2x128xf32> to vector<2x128xf32>
    %111 = arith.addf %110, %108 : vector<2x128xf32>
    %cst_41 = arith.constant 5.000000e-01 : f32
    %112 = vector.broadcast %cst_41 : f32 to vector<2x128xf32>
    %113 = arith.mulf %112, %111 : vector<2x128xf32>
    %114 = arith.select %6, %111, %113 : vector<2x128xi1>, vector<2x128xf32>
    %115 = math.tanh %114 : vector<2x128xf32>
    %cst_42 = arith.constant 5.000000e-01 : f32
    %116 = vector.broadcast %cst_42 : f32 to vector<2x128xf32>
    %117 = arith.mulf %116, %115 : vector<2x128xf32>
    %cst_43 = arith.constant 5.000000e-01 : f32
    %118 = vector.broadcast %cst_43 : f32 to vector<2x128xf32>
    %119 = arith.addf %117, %118 : vector<2x128xf32>
    %120 = arith.select %6, %115, %119 : vector<2x128xi1>, vector<2x128xf32>
    %121 = vector.extract_strided_slice %120 {offsets = [0, 0], sizes = [2, 32], strides = [1, 1]} : vector<2x128xf32> to vector<2x32xf32>
    %122 = vector.extract_strided_slice %120 {offsets = [0, 32], sizes = [2, 32], strides = [1, 1]} : vector<2x128xf32> to vector<2x32xf32>
    %123 = vector.extract_strided_slice %120 {offsets = [0, 64], sizes = [2, 32], strides = [1, 1]} : vector<2x128xf32> to vector<2x32xf32>
    %124 = vector.extract_strided_slice %120 {offsets = [0, 96], sizes = [2, 32], strides = [1, 1]} : vector<2x128xf32> to vector<2x32xf32>
    %125 = arith.mulf %122, %103 : vector<2x32xf32>
    %126 = arith.mulf %121, %123 : vector<2x32xf32>
    %127 = arith.addf %125, %126 : vector<2x32xf32>
    %128 = math.tanh %127 : vector<2x32xf32>
    %129 = arith.mulf %124, %128 : vector<2x32xf32>
    %c8 = arith.constant 8 : index
    %c0_44 = arith.constant 0 : index
    %130 = vector.load %arg9[%c8, %c0_44] : memref<16x32xf32, #tpu.memory_space<vmem>>, vector<2x32xf32>
    tpu.vector_store %arg9[%c8, %c0_44], %129 {strides = array<i32>} : memref<16x32xf32, #tpu.memory_space<vmem>>, vector<2x32xf32>,
    %131 = arith.truncf %129 : vector<2x32xf32> to vector<2x32xbf16>
    %cst_45 = arith.constant dense<0.000000e+00> : vector<2x128xf32>
    %132 = tpu.matmul %131, %0, %cst_45 {dimension_numbers = #tpu.dot_dimension_numbers<[1], [0], [0], [1], [0, 0, 1, 1], [], []>} : vector<2x32xbf16>, vector<32x128xbf16>, vector<2x128xf32> -> vector<2x128xf32>
    %c5 = arith.constant 5 : index
    %c0_46 = arith.constant 0 : index
    %c0_47 = arith.constant 0 : index
    %133 = vector.load %arg0[%c5, %c0_46, %c0_47] : memref<8x2x128xf32, #tpu.memory_space<vmem>>, vector<1x2x128xf32>
    %134 = vector.shape_cast %133 : vector<1x2x128xf32> to vector<2x128xf32>
    %135 = arith.addf %134, %132 : vector<2x128xf32>
    %cst_48 = arith.constant 5.000000e-01 : f32
    %136 = vector.broadcast %cst_48 : f32 to vector<2x128xf32>
    %137 = arith.mulf %136, %135 : vector<2x128xf32>
    %138 = arith.select %6, %135, %137 : vector<2x128xi1>, vector<2x128xf32>
    %139 = math.tanh %138 : vector<2x128xf32>
    %cst_49 = arith.constant 5.000000e-01 : f32
    %140 = vector.broadcast %cst_49 : f32 to vector<2x128xf32>
    %141 = arith.mulf %140, %139 : vector<2x128xf32>
    %cst_50 = arith.constant 5.000000e-01 : f32
    %142 = vector.broadcast %cst_50 : f32 to vector<2x128xf32>
    %143 = arith.addf %141, %142 : vector<2x128xf32>
    %144 = arith.select %6, %139, %143 : vector<2x128xi1>, vector<2x128xf32>
    %145 = vector.extract_strided_slice %144 {offsets = [0, 0], sizes = [2, 32], strides = [1, 1]} : vector<2x128xf32> to vector<2x32xf32>
    %146 = vector.extract_strided_slice %144 {offsets = [0, 32], sizes = [2, 32], strides = [1, 1]} : vector<2x128xf32> to vector<2x32xf32>
    %147 = vector.extract_strided_slice %144 {offsets = [0, 64], sizes = [2, 32], strides = [1, 1]} : vector<2x128xf32> to vector<2x32xf32>
    %148 = vector.extract_strided_slice %144 {offsets = [0, 96], sizes = [2, 32], strides = [1, 1]} : vector<2x128xf32> to vector<2x32xf32>
    %149 = arith.mulf %146, %127 : vector<2x32xf32>
    %150 = arith.mulf %145, %147 : vector<2x32xf32>
    %151 = arith.addf %149, %150 : vector<2x32xf32>
    %152 = math.tanh %151 : vector<2x32xf32>
    %153 = arith.mulf %148, %152 : vector<2x32xf32>
    %c10 = arith.constant 10 : index
    %c0_51 = arith.constant 0 : index
    %154 = vector.load %arg9[%c10, %c0_51] : memref<16x32xf32, #tpu.memory_space<vmem>>, vector<2x32xf32>
    tpu.vector_store %arg9[%c10, %c0_51], %153 {strides = array<i32>} : memref<16x32xf32, #tpu.memory_space<vmem>>, vector<2x32xf32>,
    %155 = arith.truncf %153 : vector<2x32xf32> to vector<2x32xbf16>
    %cst_52 = arith.constant dense<0.000000e+00> : vector<2x128xf32>
    %156 = tpu.matmul %155, %0, %cst_52 {dimension_numbers = #tpu.dot_dimension_numbers<[1], [0], [0], [1], [0, 0, 1, 1], [], []>} : vector<2x32xbf16>, vector<32x128xbf16>, vector<2x128xf32> -> vector<2x128xf32>
    %c6_53 = arith.constant 6 : index
    %c0_54 = arith.constant 0 : index
    %c0_55 = arith.constant 0 : index
    %157 = vector.load %arg0[%c6_53, %c0_54, %c0_55] : memref<8x2x128xf32, #tpu.memory_space<vmem>>, vector<1x2x128xf32>
    %158 = vector.shape_cast %157 : vector<1x2x128xf32> to vector<2x128xf32>
    %159 = arith.addf %158, %156 : vector<2x128xf32>
    %cst_56 = arith.constant 5.000000e-01 : f32
    %160 = vector.broadcast %cst_56 : f32 to vector<2x128xf32>
    %161 = arith.mulf %160, %159 : vector<2x128xf32>
    %162 = arith.select %6, %159, %161 : vector<2x128xi1>, vector<2x128xf32>
    %163 = math.tanh %162 : vector<2x128xf32>
    %cst_57 = arith.constant 5.000000e-01 : f32
    %164 = vector.broadcast %cst_57 : f32 to vector<2x128xf32>
    %165 = arith.mulf %164, %163 : vector<2x128xf32>
    %cst_58 = arith.constant 5.000000e-01 : f32
    %166 = vector.broadcast %cst_58 : f32 to vector<2x128xf32>
    %167 = arith.addf %165, %166 : vector<2x128xf32>
    %168 = arith.select %6, %163, %167 : vector<2x128xi1>, vector<2x128xf32>
    %169 = vector.extract_strided_slice %168 {offsets = [0, 0], sizes = [2, 32], strides = [1, 1]} : vector<2x128xf32> to vector<2x32xf32>
    %170 = vector.extract_strided_slice %168 {offsets = [0, 32], sizes = [2, 32], strides = [1, 1]} : vector<2x128xf32> to vector<2x32xf32>
    %171 = vector.extract_strided_slice %168 {offsets = [0, 64], sizes = [2, 32], strides = [1, 1]} : vector<2x128xf32> to vector<2x32xf32>
    %172 = vector.extract_strided_slice %168 {offsets = [0, 96], sizes = [2, 32], strides = [1, 1]} : vector<2x128xf32> to vector<2x32xf32>
    %173 = arith.mulf %170, %151 : vector<2x32xf32>
    %174 = arith.mulf %169, %171 : vector<2x32xf32>
    %175 = arith.addf %173, %174 : vector<2x32xf32>
    %176 = math.tanh %175 : vector<2x32xf32>
    %177 = arith.mulf %172, %176 : vector<2x32xf32>
    %c12 = arith.constant 12 : index
    %c0_59 = arith.constant 0 : index
    %178 = vector.load %arg9[%c12, %c0_59] : memref<16x32xf32, #tpu.memory_space<vmem>>, vector<2x32xf32>
    tpu.vector_store %arg9[%c12, %c0_59], %177 {strides = array<i32>} : memref<16x32xf32, #tpu.memory_space<vmem>>, vector<2x32xf32>,
    %179 = arith.truncf %177 : vector<2x32xf32> to vector<2x32xbf16>
    %cst_60 = arith.constant dense<0.000000e+00> : vector<2x128xf32>
    %180 = tpu.matmul %179, %0, %cst_60 {dimension_numbers = #tpu.dot_dimension_numbers<[1], [0], [0], [1], [0, 0, 1, 1], [], []>} : vector<2x32xbf16>, vector<32x128xbf16>, vector<2x128xf32> -> vector<2x128xf32>
    %c7 = arith.constant 7 : index
    %c0_61 = arith.constant 0 : index
    %c0_62 = arith.constant 0 : index
    %181 = vector.load %arg0[%c7, %c0_61, %c0_62] : memref<8x2x128xf32, #tpu.memory_space<vmem>>, vector<1x2x128xf32>
    %182 = vector.shape_cast %181 : vector<1x2x128xf32> to vector<2x128xf32>
    %183 = arith.addf %182, %180 : vector<2x128xf32>
    %cst_63 = arith.constant 5.000000e-01 : f32
    %184 = vector.broadcast %cst_63 : f32 to vector<2x128xf32>
    %185 = arith.mulf %184, %183 : vector<2x128xf32>
    %186 = arith.select %6, %183, %185 : vector<2x128xi1>, vector<2x128xf32>
    %187 = math.tanh %186 : vector<2x128xf32>
    %cst_64 = arith.constant 5.000000e-01 : f32
    %188 = vector.broadcast %cst_64 : f32 to vector<2x128xf32>
    %189 = arith.mulf %188, %187 : vector<2x128xf32>
    %cst_65 = arith.constant 5.000000e-01 : f32
    %190 = vector.broadcast %cst_65 : f32 to vector<2x128xf32>
    %191 = arith.addf %189, %190 : vector<2x128xf32>
    %192 = arith.select %6, %187, %191 : vector<2x128xi1>, vector<2x128xf32>
    %193 = vector.extract_strided_slice %192 {offsets = [0, 0], sizes = [2, 32], strides = [1, 1]} : vector<2x128xf32> to vector<2x32xf32>
    %194 = vector.extract_strided_slice %192 {offsets = [0, 32], sizes = [2, 32], strides = [1, 1]} : vector<2x128xf32> to vector<2x32xf32>
    %195 = vector.extract_strided_slice %192 {offsets = [0, 64], sizes = [2, 32], strides = [1, 1]} : vector<2x128xf32> to vector<2x32xf32>
    %196 = vector.extract_strided_slice %192 {offsets = [0, 96], sizes = [2, 32], strides = [1, 1]} : vector<2x128xf32> to vector<2x32xf32>
    %197 = arith.mulf %194, %175 : vector<2x32xf32>
    %198 = arith.mulf %193, %195 : vector<2x32xf32>
    %199 = arith.addf %197, %198 : vector<2x32xf32>
    %200 = math.tanh %199 : vector<2x32xf32>
    %201 = arith.mulf %196, %200 : vector<2x32xf32>
    %c14 = arith.constant 14 : index
    %c0_66 = arith.constant 0 : index
    %202 = vector.load %arg9[%c14, %c0_66] : memref<16x32xf32, #tpu.memory_space<vmem>>, vector<2x32xf32>
    tpu.vector_store %arg9[%c14, %c0_66], %201 {strides = array<i32>} : memref<16x32xf32, #tpu.memory_space<vmem>>, vector<2x32xf32>,
    %c0_67 = arith.constant 0 : index
    %c0_68 = arith.constant 0 : index
    %c0_69 = arith.constant 0 : index
    %203 = vector.load %arg7[%c0_67, %c0_68, %c0_69] : memref<1x2x32xf32, #tpu.memory_space<vmem>>, vector<1x2x32xf32>
    %204 = vector.shape_cast %203 : vector<1x2x32xf32> to vector<2x32xf32>
    %205 = vector.shape_cast %201 : vector<2x32xf32> to vector<1x2x32xf32>
    tpu.vector_store %arg7[%c0_67, %c0_68, %c0_69], %205 {strides = array<i32>} : memref<1x2x32xf32, #tpu.memory_space<vmem>>, vector<1x2x32xf32>,
    %c0_70 = arith.constant 0 : index
    %c0_71 = arith.constant 0 : index
    %c0_72 = arith.constant 0 : index
    %206 = vector.load %arg8[%c0_70, %c0_71, %c0_72] : memref<1x2x32xf32, #tpu.memory_space<vmem>>, vector<1x2x32xf32>
    %207 = vector.shape_cast %206 : vector<1x2x32xf32> to vector<2x32xf32>
    %208 = vector.shape_cast %199 : vector<2x32xf32> to vector<1x2x32xf32>
    tpu.vector_store %arg8[%c0_70, %c0_71, %c0_72], %208 {strides = array<i32>} : memref<1x2x32xf32, #tpu.memory_space<vmem>>, vector<1x2x32xf32>,
    %c0_73 = arith.constant 0 : index
    %c0_74 = arith.constant 0 : index
    %209 = vector.load %arg9[%c0_73, %c0_74] : memref<16x32xf32, #tpu.memory_space<vmem>>, vector<16x32xf32>
    %210 = arith.truncf %209 : vector<16x32xf32> to vector<16x32xbf16>
    %c0_75 = arith.constant 0 : index
    %c0_76 = arith.constant 0 : index
    %211 = vector.load %arg4[%c0_75, %c0_76] : memref<32x128xbf16, #tpu.memory_space<vmem>>, vector<32x128xbf16>
    %cst_77 = arith.constant dense<0.000000e+00> : vector<16x128xf32>
    %212 = tpu.matmul %210, %211, %cst_77 {dimension_numbers = #tpu.dot_dimension_numbers<[1], [0], [0], [1], [0, 0, 1, 1], [], []>} : vector<16x32xbf16>, vector<32x128xbf16>, vector<16x128xf32> -> vector<16x128xf32>
    %c0_78 = arith.constant 0 : index
    %c0_79 = arith.constant 0 : index
    %213 = vector.load %arg5[%c0_78, %c0_79] : memref<1x128xf32, #tpu.memory_space<vmem>>, vector<1x128xf32>
    %214 = vector.broadcast %213 : vector<1x128xf32> to vector<16x128xf32>
    %215 = arith.addf %212, %214 : vector<16x128xf32>
    %c0_80 = arith.constant 0 : index
    %c0_81 = arith.constant 0 : index
    %216 = vector.load %arg6[%c0_80, %c0_81] : memref<16x128xf32, #tpu.memory_space<vmem>>, vector<16x128xf32>
    tpu.vector_store %arg6[%c0_80, %c0_81], %215 {strides = array<i32>} : memref<16x128xf32, #tpu.memory_space<vmem>>, vector<16x128xf32>,
    return
  }
}

</mosaic_0001>

<llo_original>
// kernel: char_lstm_forward.1
$region0: #{char_lstm_forward.1}
  #allocation0 [shape = 'u32[]', space=smem, size = 0x4, offset = 0x4, fixed_abs, tag = 'smem constant byte address 0x4 - core index']
  #allocation1 [shape = 'u32[144,128]{1,0:T(1,128)}', space=vmem, size = 0x12000, scoped, tag = 'internal scratch']
  #allocation2 [shape = 'f32[16,32]{1,0:T(8,128)}', space=vmem, size = 0x2000, scoped, tag = 'scratch operand']
  %s0 = inlined_call_operand.vmem [shape: f32[8,2,128], index: 0, kind: input, shape index: {}]
  %s1 = inlined_call_operand.vmem [shape: f32[1,2,32], index: 1, kind: input, shape index: {}]
  %s2 = inlined_call_operand.vmem [shape: f32[1,2,32], index: 2, kind: input, shape index: {}]
  %s3 = inlined_call_operand.vmem [shape: bf16[32,128], index: 3, kind: input, shape index: {}]
  %s4 = inlined_call_operand.vmem [shape: bf16[32,128], index: 4, kind: input, shape index: {}]
  %s5 = inlined_call_operand.vmem [shape: f32[1,128], index: 5, kind: input, shape index: {}]
  %s6 = inlined_call_operand.vmem [shape: f32[16,128], index: 6, kind: output, shape index: {0}]
  %s7 = inlined_call_operand.hbm [shape: f32[1,2,32], index: 7, kind: output, shape index: {1}]
  %s8 = inlined_call_operand.hbm [shape: f32[1,2,32], index: 8, kind: output, shape index: {2}]
  %9 = xla_tuple %s6, %s7, %s8
  %s10 = sld [smem:[#allocation0]]
  $region50: #{char_lstm_forward.1} parent=0
    _
  %s12 = ssub.s32 1, %s10
  %s13 = scalar_select 0, %s12, %s10
  $region1: #{char_lstm_forward.1} parent=0
    #allocation3 [shape = 'u8[1024]{0}', space=vmem, size = 0x400, scoped, tag = 'output window, operand 1, single buffered']
    #allocation4 [shape = 's32[1]{0}', space=sflag, size = 0x4, scoped, tag = 'scoped memory for char_lstm_forward.1']
    #allocation5 [shape = 'u8[1024]{0}', space=vmem, size = 0x400, scoped, tag = 'output window, operand 2, single buffered']
    #allocation6 [shape = 's32[1]{0}', space=sflag, size = 0x4, scoped, tag = 'scoped memory for char_lstm_forward.1']
    %14 = vsyncpa [#allocation4], 0
    %15 = vsyncpa [#allocation6], 0
    // Predicated region
    $region2: #{char_lstm_forward.1} parent=1 // pred_check
      _
    $region3: #{char_lstm_forward.1} parent=1 // pred_check_branch
      %17 = sbr.rel (0) target = $region5
    $region4: #{char_lstm_forward.1} parent=1 // pred_region
      _
    $region5: #{char_lstm_forward.1} parent=1 // pred_fallthru
      _
    // Predicated region
    $region6: #{char_lstm_forward.1} parent=1 // pred_check
      _
    $region7: #{char_lstm_forward.1} parent=1 // pred_check_branch
      %19 = sbr.rel (0) target = $region9
    $region8: #{char_lstm_forward.1} parent=1 // pred_region
      _
    $region9: #{char_lstm_forward.1} parent=1 // pred_fallthru
      _
    // Predicated region
    $region10: #{char_lstm_forward.1} parent=1 // pred_check
      _
    $region11: #{char_lstm_forward.1} parent=1 // pred_check_branch
      %21 = sbr.rel (0) target = $region13
    $region12: #{char_lstm_forward.1} parent=1 // pred_region
      _
    $region13: #{char_lstm_forward.1} parent=1 // pred_fallthru
      _
    // Predicated region
    $region14: #{char_lstm_forward.1} parent=1 // pred_check
      _
    $region15: #{char_lstm_forward.1} parent=1 // pred_check_branch
      %23 = sbr.rel (0) target = $region17
    $region16: #{char_lstm_forward.1} parent=1 // pred_region
      _
    $region17: #{char_lstm_forward.1} parent=1 // pred_fallthru
      _
    // Predicated region
    $region18: #{char_lstm_forward.1} parent=1 // pred_check
      _
    $region19: #{char_lstm_forward.1} parent=1 // pred_check_branch
      %25 = sbr.rel (0) target = $region21
    $region20: #{char_lstm_forward.1} parent=1 // pred_region
      _
    $region21: #{char_lstm_forward.1} parent=1 // pred_fallthru
      _
    // Predicated region
    $region22: #{char_lstm_forward.1} parent=1 // pred_check
      _
    $region23: #{char_lstm_forward.1} parent=1 // pred_check_branch
      %27 = sbr.rel (0) target = $region25
    $region24: #{char_lstm_forward.1} parent=1 // pred_region
      _
    $region25: #{char_lstm_forward.1} parent=1 // pred_fallthru
      _
    %v29 = vld [vmem:[%s3] sm:$0xf]
    %v30 = vld [vmem:[%s3 + $0x4] sm:$0xf]
    %v31 = vld [vmem:[%s3 + $0x8] sm:$0xf]
    %v32 = vld [vmem:[%s3 + $0xc] sm:$0xf]
    %v33 = vlaneseq
    %v34 = vand.u32 %v33, 127
    %vm35 = vcmp.ge.s32.totalorder %v34, 64
    %vm36 = vcmp.lt.s32.totalorder %v34, 96
    %vm37 = vmand %vm35, %vm36
    %v38 = vld [vmem:[%s1] sm:$0x3]
    %v39 = vld [vmem:[%s2] sm:$0x3]
    %v40 = vpack.c.bf16 %v38, %v38
    %v45 = vunpack.c.l.b16 %v29
    %v46 = vunpack.c.l.b16 %v30
    %v47 = vunpack.c.l.b16 %v31
    %v48 = vunpack.c.l.b16 %v32
    %v49 = vpack.c.b16 %v46, %v45
    %v50 = vpack.c.b16 %v48, %v47
    %vm53 = vcmask 261120
    %v55 = vsel %vm53, %v40, 0
    %57 = vmatprep.subr.bf16.mxu0 0
    %58 = vmatpush1.bf16.msra.mxu0 %v49
    %59 = vmatprep.subr.bf16.mxu0 0
    %60 = vmatpush1.bf16.msra.mxu0 %v50
    %61 = vmatprep.subr.bf16.mxu0 0
    %62 = vmatpush1.bf16.msra.mxu0 0
    %63 = vmatprep.subr.bf16.mxu0 0
    %64 = vmatpush1.bf16.msra.mxu0 0
    %65 = vmatprep.subr.bf16.mxu0 0
    %66 = vmatpush1.bf16.msra.mxu0 0
    %67 = vmatprep.subr.bf16.mxu0 0
    %68 = vmatpush1.bf16.msra.mxu0 0
    %69 = vmatprep.subr.bf16.mxu0 0
    %70 = vmatpush1.bf16.msra.mxu0 0
    %71 = vmatprep.subr.bf16.mxu0 0
    %72 = vmatpush1.bf16.msra.mxu0 0
    %73 = vmatprep.subr.bf16.mxu0 0
    %74 = vmatpush1.bf16.msra.mxu0 0
    %75 = vmatprep.subr.bf16.mxu0 0
    %76 = vmatpush1.bf16.msra.mxu0 0
    %77 = vmatprep.subr.bf16.mxu0 0
    %78 = vmatpush1.bf16.msra.mxu0 0
    %79 = vmatprep.subr.bf16.mxu0 0
    %80 = vmatpush1.bf16.msra.mxu0 0
    %81 = vmatprep.subr.bf16.mxu0 0
    %82 = vmatpush1.bf16.msra.mxu0 0
    %83 = vmatprep.subr.bf16.mxu0 0
    %84 = vmatpush1.bf16.msra.mxu0 0
    %85 = vmatprep.subr.bf16.mxu0 0
    %86 = vmatpush1.bf16.msra.mxu0 0
    %87 = vmatprep.subr.bf16.mxu0 0
    %88 = vmatpush1.bf16.msra.mxu0 0
    %89 = vmatprep.mubr.bf16.mxu0 0
    %90 = vmatmul.mubr.bf16.gmra.mrb[0].mxu0 %v55
    %v91 = vpop.f32.mrb[0].mxu0
    %v92 = vadd.f32 0.0, %v91
    %v93 = vpop.f32.mrb[0].mxu0
    %v94 = vpop.f32.mrb[0].mxu0
    %v95 = vpop.f32.mrb[0].mxu0
    %96 = vdwg.mxu0
    %v97 = vld [vmem:[%s0] sm:$0x3]
    %v98 = vadd.f32 %v97, %v92
    %v99 = vmul.f32 %v98, 0.5
    %v100 = vsel %vm37, %v98, %v99
    %v101 = vtanh.pop %v100
    %v102 = vmul.f32 %v101, 0.5
    %v103 = vadd.f32 %v102, 0.5
    %v104 = vsel %vm37, %v101, %v103
    %106 = vrot.lane.b32.xlu0 %v39, 32
    %v107 = vpop.permute.xlu0 %106
    %v109 = vmul.f32 %v104, %v107
    %111 = vrot.lane.b32.xlu0 %v104, 64
    %v112 = vpop.permute.xlu0 %111
    %v114 = vmul.f32 %v104, %v112
    %116 = vrot.lane.b32.xlu0 %v114, 32
    %v117 = vpop.permute.xlu0 %116
    %v119 = vadd.f32 %v109, %v117
    %v120 = vtanh.pop %v119
    %122 = vrot.lane.b32.xlu0 %v120, 64
    %v123 = vpop.permute.xlu0 %122
    %v125 = vmul.f32 %v104, %v123
    %127 = vrot.lane.b32.xlu0 %v125, 32
    %v128 = vpop.permute.xlu0 %127
    %vm130 = vcmask 254976
    %131 = vst.msk [vmem:[#allocation2] sm:$0x3] %vm130, %v128
    %v132 = vpack.c.bf16 %v125, %v125
    %134 = vrot.lane.b32.xlu0 %v132, 32
    %v135 = vpop.permute.xlu0 %134
    %v137 = vsel %vm53, %v135, 0
    %139 = vmatprep.subr.bf16.mxu0 0
    %140 = vmatpush1.bf16.msra.mxu0 %v49
    %141 = vmatprep.subr.bf16.mxu0 0
    %142 = vmatpush1.bf16.msra.mxu0 %v50
    %143 = vmatprep.subr.bf16.mxu0 0
    %144 = vmatpush1.bf16.msra.mxu0 0
    %145 = vmatprep.subr.bf16.mxu0 0
    %146 = vmatpush1.bf16.msra.mxu0 0
    %147 = vmatprep.subr.bf16.mxu0 0
    %148 = vmatpush1.bf16.msra.mxu0 0
    %149 = vmatprep.subr.bf16.mxu0 0
    %150 = vmatpush1.bf16.msra.mxu0 0
    %151 = vmatprep.subr.bf16.mxu0 0
    %152 = vmatpush1.bf16.msra.mxu0 0
    %153 = vmatprep.subr.bf16.mxu0 0
    %154 = vmatpush1.bf16.msra.mxu0 0
    %155 = vmatprep.subr.bf16.mxu0 0
    %156 = vmatpush1.bf16.msra.mxu0 0
    %157 = vmatprep.subr.bf16.mxu0 0
    %158 = vmatpush1.bf16.msra.mxu0 0
    %159 = vmatprep.subr.bf16.mxu0 0
    %160 = vmatpush1.bf16.msra.mxu0 0
    %161 = vmatprep.subr.bf16.mxu0 0
    %162 = vmatpush1.bf16.msra.mxu0 0
    %163 = vmatprep.subr.bf16.mxu0 0
    %164 = vmatpush1.bf16.msra.mxu0 0
    %165 = vmatprep.subr.bf16.mxu0 0
    %166 = vmatpush1.bf16.msra.mxu0 0
    %167 = vmatprep.subr.bf16.mxu0 0
    %168 = vmatpush1.bf16.msra.mxu0 0
    %169 = vmatprep.subr.bf16.mxu0 0
    %170 = vmatpush1.bf16.msra.mxu0 0
    %171 = vmatprep.mubr.bf16.mxu0 0
    %172 = vmatmul.mubr.bf16.gmra.mrb[0].mxu0 %v137
    %v173 = vpop.f32.mrb[0].mxu0
    %v174 = vadd.f32 0.0, %v173
    %v175 = vpop.f32.mrb[0].mxu0
    %v176 = vpop.f32.mrb[0].mxu0
    %v177 = vpop.f32.mrb[0].mxu0
    %178 = vdwg.mxu0
    %s179 = scalar_lea.vmem %s0, 2
    %v180 = vld [vmem:[%s179] sm:$0x3]
    %v181 = vadd.f32 %v180, %v174
    %v182 = vmul.f32 %v181, 0.5
    %v183 = vsel %vm37, %v181, %v182
    %v184 = vtanh.pop %v183
    %v185 = vmul.f32 %v184, 0.5
    %v186 = vadd.f32 %v185, 0.5
    %v187 = vsel %vm37, %v184, %v186
    %v188 = vmul.f32 %v187, %v119
    %190 = vrot.lane.b32.xlu0 %v187, 64
    %v191 = vpop.permute.xlu0 %190
    %v193 = vmul.f32 %v187, %v191
    %195 = vrot.lane.b32.xlu0 %v193, 32
    %v196 = vpop.permute.xlu0 %195
    %v198 = vadd.f32 %v188, %v196
    %v199 = vtanh.pop %v198
    %201 = vrot.lane.b32.xlu0 %v199, 64
    %v202 = vpop.permute.xlu0 %201
    %v204 = vmul.f32 %v187, %v202
    %206 = vrot.lane.b32.xlu0 %v204, 32
    %v207 = vpop.permute.xlu0 %206
    %209 = vst.msk [vmem:[#allocation2 + $0x2] sm:$0x3] %vm130, %v207
    %v210 = vpack.c.bf16 %v204, %v204
    %212 = vrot.lane.b32.xlu0 %v210, 32
    %v213 = vpop.permute.xlu0 %212
    %v215 = vsel %vm53, %v213, 0
    %217 = vmatprep.subr.bf16.mxu0 0
    %218 = vmatpush1.bf16.msra.mxu0 %v49
    %219 = vmatprep.subr.bf16.mxu0 0
    %220 = vmatpush1.bf16.msra.mxu0 %v50
    %221 = vmatprep.subr.bf16.mxu0 0
    %222 = vmatpush1.bf16.msra.mxu0 0
    %223 = vmatprep.subr.bf16.mxu0 0
    %224 = vmatpush1.bf16.msra.mxu0 0
    %225 = vmatprep.subr.bf16.mxu0 0
    %226 = vmatpush1.bf16.msra.mxu0 0
    %227 = vmatprep.subr.bf16.mxu0 0
    %228 = vmatpush1.bf16.msra.mxu0 0
    %229 = vmatprep.subr.bf16.mxu0 0
    %230 = vmatpush1.bf16.msra.mxu0 0
    %231 = vmatprep.subr.bf16.mxu0 0
    %232 = vmatpush1.bf16.msra.mxu0 0
    %233 = vmatprep.subr.bf16.mxu0 0
    %234 = vmatpush1.bf16.msra.mxu0 0
    %235 = vmatprep.subr.bf16.mxu0 0
    %236 = vmatpush1.bf16.msra.mxu0 0
    %237 = vmatprep.subr.bf16.mxu0 0
    %238 = vmatpush1.bf16.msra.mxu0 0
    %239 = vmatprep.subr.bf16.mxu0 0
    %240 = vmatpush1.bf16.msra.mxu0 0
    %241 = vmatprep.subr.bf16.mxu0 0
    %242 = vmatpush1.bf16.msra.mxu0 0
    %243 = vmatprep.subr.bf16.mxu0 0
    %244 = vmatpush1.bf16.msra.mxu0 0
    %245 = vmatprep.subr.bf16.mxu0 0
    %246 = vmatpush1.bf16.msra.mxu0 0
    %247 = vmatprep.subr.bf16.mxu0 0
    %248 = vmatpush1.bf16.msra.mxu0 0
    %249 = vmatprep.mubr.bf16.mxu0 0
    %250 = vmatmul.mubr.bf16.gmra.mrb[0].mxu0 %v215
    %v251 = vpop.f32.mrb[0].mxu0
    %v252 = vadd.f32 0.0, %v251
    %v253 = vpop.f32.mrb[0].mxu0
    %v254 = vpop.f32.mrb[0].mxu0
    %v255 = vpop.f32.mrb[0].mxu0
    %256 = vdwg.mxu0
    %s257 = scalar_lea.vmem %s0, 4
    %v258 = vld [vmem:[%s257] sm:$0x3]
    %v259 = vadd.f32 %v258, %v252
    %v260 = vmul.f32 %v259, 0.5
    %v261 = vsel %vm37, %v259, %v260
    %v262 = vtanh.pop %v261
    %v263 = vmul.f32 %v262, 0.5
    %v264 = vadd.f32 %v263, 0.5
    %v265 = vsel %vm37, %v262, %v264
    %v266 = vmul.f32 %v265, %v198
    %268 = vrot.lane.b32.xlu0 %v265, 64
    %v269 = vpop.permute.xlu0 %268
    %v271 = vmul.f32 %v265, %v269
    %273 = vrot.lane.b32.xlu0 %v271, 32
    %v274 = vpop.permute.xlu0 %273
    %v276 = vadd.f32 %v266, %v274
    %v277 = vtanh.pop %v276
    %279 = vrot.lane.b32.xlu0 %v277, 64
    %v280 = vpop.permute.xlu0 %279
    %v282 = vmul.f32 %v265, %v280
    %284 = vrot.lane.b32.xlu0 %v282, 32
    %v285 = vpop.permute.xlu0 %284
    %287 = vst.msk [vmem:[#allocation2 + $0x4] sm:$0x3] %vm130, %v285
    %v288 = vpack.c.bf16 %v282, %v282
    %290 = vrot.lane.b32.xlu0 %v288, 32
    %v291 = vpop.permute.xlu0 %290
    %v293 = vsel %vm53, %v291, 0
    %295 = vmatprep.subr.bf16.mxu0 0
    %296 = vmatpush1.bf16.msra.mxu0 %v49
    %297 = vmatprep.subr.bf16.mxu0 0
    %298 = vmatpush1.bf16.msra.mxu0 %v50
    %299 = vmatprep.subr.bf16.mxu0 0
    %300 = vmatpush1.bf16.msra.mxu0 0
    %301 = vmatprep.subr.bf16.mxu0 0
    %302 = vmatpush1.bf16.msra.mxu0 0
    %303 = vmatprep.subr.bf16.mxu0 0
    %304 = vmatpush1.bf16.msra.mxu0 0
    %305 = vmatprep.subr.bf16.mxu0 0
    %306 = vmatpush1.bf16.msra.mxu0 0
    %307 = vmatprep.subr.bf16.mxu0 0
    %308 = vmatpush1.bf16.msra.mxu0 0
    %309 = vmatprep.subr.bf16.mxu0 0
    %310 = vmatpush1.bf16.msra.mxu0 0
    %311 = vmatprep.subr.bf16.mxu0 0
    %312 = vmatpush1.bf16.msra.mxu0 0
    %313 = vmatprep.subr.bf16.mxu0 0
    %314 = vmatpush1.bf16.msra.mxu0 0
    %315 = vmatprep.subr.bf16.mxu0 0
    %316 = vmatpush1.bf16.msra.mxu0 0
    %317 = vmatprep.subr.bf16.mxu0 0
    %318 = vmatpush1.bf16.msra.mxu0 0
    %319 = vmatprep.subr.bf16.mxu0 0
    %320 = vmatpush1.bf16.msra.mxu0 0
    %321 = vmatprep.subr.bf16.mxu0 0
    %322 = vmatpush1.bf16.msra.mxu0 0
    %323 = vmatprep.subr.bf16.mxu0 0
    %324 = vmatpush1.bf16.msra.mxu0 0
    %325 = vmatprep.subr.bf16.mxu0 0
    %326 = vmatpush1.bf16.msra.mxu0 0
    %327 = vmatprep.mubr.bf16.mxu0 0
    %328 = vmatmul.mubr.bf16.gmra.mrb[0].mxu0 %v293
    %v329 = vpop.f32.mrb[0].mxu0
    %v330 = vadd.f32 0.0, %v329
    %v331 = vpop.f32.mrb[0].mxu0
    %v332 = vpop.f32.mrb[0].mxu0
    %v333 = vpop.f32.mrb[0].mxu0
    %334 = vdwg.mxu0
    %s335 = scalar_lea.vmem %s0, 6
    %v336 = vld [vmem:[%s335] sm:$0x3]
    %v337 = vadd.f32 %v336, %v330
    %v338 = vmul.f32 %v337, 0.5
    %v339 = vsel %vm37, %v337, %v338
    %v340 = vtanh.pop %v339
    %v341 = vmul.f32 %v340, 0.5
    %v342 = vadd.f32 %v341, 0.5
    %v343 = vsel %vm37, %v340, %v342
    %v344 = vmul.f32 %v343, %v276
    %346 = vrot.lane.b32.xlu0 %v343, 64
    %v347 = vpop.permute.xlu0 %346
    %v349 = vmul.f32 %v343, %v347
    %351 = vrot.lane.b32.xlu0 %v349, 32
    %v352 = vpop.permute.xlu0 %351
    %v354 = vadd.f32 %v344, %v352
    %v355 = vtanh.pop %v354
    %357 = vrot.lane.b32.xlu0 %v355, 64
    %v358 = vpop.permute.xlu0 %357
    %v360 = vmul.f32 %v343, %v358
    %362 = vrot.lane.b32.xlu0 %v360, 32
    %v363 = vpop.permute.xlu0 %362
    %365 = vst.msk [vmem:[#allocation2 + $0x6] sm:$0x3] %vm130, %v363
    %v366 = vpack.c.bf16 %v360, %v360
    %368 = vrot.lane.b32.xlu0 %v366, 32
    %v369 = vpop.permute.xlu0 %368
    %v371 = vsel %vm53, %v369, 0
    %373 = vmatprep.subr.bf16.mxu0 0
    %374 = vmatpush1.bf16.msra.mxu0 %v49
    %375 = vmatprep.subr.bf16.mxu0 0
    %376 = vmatpush1.bf16.msra.mxu0 %v50
    %377 = vmatprep.subr.bf16.mxu0 0
    %378 = vmatpush1.bf16.msra.mxu0 0
    %379 = vmatprep.subr.bf16.mxu0 0
    %380 = vmatpush1.bf16.msra.mxu0 0
    %381 = vmatprep.subr.bf16.mxu0 0
    %382 = vmatpush1.bf16.msra.mxu0 0
    %383 = vmatprep.subr.bf16.mxu0 0
    %384 = vmatpush1.bf16.msra.mxu0 0
    %385 = vmatprep.subr.bf16.mxu0 0
    %386 = vmatpush1.bf16.msra.mxu0 0
    %387 = vmatprep.subr.bf16.mxu0 0
    %388 = vmatpush1.bf16.msra.mxu0 0
    %389 = vmatprep.subr.bf16.mxu0 0
    %390 = vmatpush1.bf16.msra.mxu0 0
    %391 = vmatprep.subr.bf16.mxu0 0
    %392 = vmatpush1.bf16.msra.mxu0 0
    %393 = vmatprep.subr.bf16.mxu0 0
    %394 = vmatpush1.bf16.msra.mxu0 0
    %395 = vmatprep.subr.bf16.mxu0 0
    %396 = vmatpush1.bf16.msra.mxu0 0
    %397 = vmatprep.subr.bf16.mxu0 0
    %398 = vmatpush1.bf16.msra.mxu0 0
    %399 = vmatprep.subr.bf16.mxu0 0
    %400 = vmatpush1.bf16.msra.mxu0 0
    %401 = vmatprep.subr.bf16.mxu0 0
    %402 = vmatpush1.bf16.msra.mxu0 0
    %403 = vmatprep.subr.bf16.mxu0 0
    %404 = vmatpush1.bf16.msra.mxu0 0
    %405 = vmatprep.mubr.bf16.mxu0 0
    %406 = vmatmul.mubr.bf16.gmra.mrb[0].mxu0 %v371
    %v407 = vpop.f32.mrb[0].mxu0
    %v408 = vadd.f32 0.0, %v407
    %v409 = vpop.f32.mrb[0].mxu0
    %v410 = vpop.f32.mrb[0].mxu0
    %v411 = vpop.f32.mrb[0].mxu0
    %412 = vdwg.mxu0
    %s413 = scalar_lea.vmem %s0, 8
    %v414 = vld [vmem:[%s413] sm:$0x3]
    %v415 = vadd.f32 %v414, %v408
    %v416 = vmul.f32 %v415, 0.5
    %v417 = vsel %vm37, %v415, %v416
    %v418 = vtanh.pop %v417
    %v419 = vmul.f32 %v418, 0.5
    %v420 = vadd.f32 %v419, 0.5
    %v421 = vsel %vm37, %v418, %v420
    %v422 = vmul.f32 %v421, %v354
    %424 = vrot.lane.b32.xlu0 %v421, 64
    %v425 = vpop.permute.xlu0 %424
    %v427 = vmul.f32 %v421, %v425
    %429 = vrot.lane.b32.xlu0 %v427, 32
    %v430 = vpop.permute.xlu0 %429
    %v432 = vadd.f32 %v422, %v430
    %v433 = vtanh.pop %v432
    %435 = vrot.lane.b32.xlu0 %v433, 64
    %v436 = vpop.permute.xlu0 %435
    %v438 = vmul.f32 %v421, %v436
    %440 = vrot.lane.b32.xlu0 %v438, 32
    %v441 = vpop.permute.xlu0 %440
    %443 = vst.msk [vmem:[#allocation2 + $0x8] sm:$0x3] %vm130, %v441
    %v444 = vpack.c.bf16 %v438, %v438
    %446 = vrot.lane.b32.xlu0 %v444, 32
    %v447 = vpop.permute.xlu0 %446
    %v449 = vsel %vm53, %v447, 0
    %451 = vmatprep.subr.bf16.mxu0 0
    %452 = vmatpush1.bf16.msra.mxu0 %v49
    %453 = vmatprep.subr.bf16.mxu0 0
    %454 = vmatpush1.bf16.msra.mxu0 %v50
    %455 = vmatprep.subr.bf16.mxu0 0
    %456 = vmatpush1.bf16.msra.mxu0 0
    %457 = vmatprep.subr.bf16.mxu0 0
    %458 = vmatpush1.bf16.msra.mxu0 0
    %459 = vmatprep.subr.bf16.mxu0 0
    %460 = vmatpush1.bf16.msra.mxu0 0
    %461 = vmatprep.subr.bf16.mxu0 0
    %462 = vmatpush1.bf16.msra.mxu0 0
    %463 = vmatprep.subr.bf16.mxu0 0
    %464 = vmatpush1.bf16.msra.mxu0 0
    %465 = vmatprep.subr.bf16.mxu0 0
    %466 = vmatpush1.bf16.msra.mxu0 0
    %467 = vmatprep.subr.bf16.mxu0 0
    %468 = vmatpush1.bf16.msra.mxu0 0
    %469 = vmatprep.subr.bf16.mxu0 0
    %470 = vmatpush1.bf16.msra.mxu0 0
    %471 = vmatprep.subr.bf16.mxu0 0
    %472 = vmatpush1.bf16.msra.mxu0 0
    %473 = vmatprep.subr.bf16.mxu0 0
    %474 = vmatpush1.bf16.msra.mxu0 0
    %475 = vmatprep.subr.bf16.mxu0 0
    %476 = vmatpush1.bf16.msra.mxu0 0
    %477 = vmatprep.subr.bf16.mxu0 0
    %478 = vmatpush1.bf16.msra.mxu0 0
    %479 = vmatprep.subr.bf16.mxu0 0
    %480 = vmatpush1.bf16.msra.mxu0 0
    %481 = vmatprep.subr.bf16.mxu0 0
    %482 = vmatpush1.bf16.msra.mxu0 0
    %483 = vmatprep.mubr.bf16.mxu0 0
    %484 = vmatmul.mubr.bf16.gmra.mrb[0].mxu0 %v449
    %v485 = vpop.f32.mrb[0].mxu0
    %v486 = vadd.f32 0.0, %v485
    %v487 = vpop.f32.mrb[0].mxu0
    %v488 = vpop.f32.mrb[0].mxu0
    %v489 = vpop.f32.mrb[0].mxu0
    %490 = vdwg.mxu0
    %s491 = scalar_lea.vmem %s0, 10
    %v492 = vld [vmem:[%s491] sm:$0x3]
    %v493 = vadd.f32 %v492, %v486
    %v494 = vmul.f32 %v493, 0.5
    %v495 = vsel %vm37, %v493, %v494
    %v496 = vtanh.pop %v495
    %v497 = vmul.f32 %v496, 0.5
    %v498 = vadd.f32 %v497, 0.5
    %v499 = vsel %vm37, %v496, %v498
    %v500 = vmul.f32 %v499, %v432
    %502 = vrot.lane.b32.xlu0 %v499, 64
    %v503 = vpop.permute.xlu0 %502
    %v505 = vmul.f32 %v499, %v503
    %507 = vrot.lane.b32.xlu0 %v505, 32
    %v508 = vpop.permute.xlu0 %507
    %v510 = vadd.f32 %v500, %v508
    %v511 = vtanh.pop %v510
    %513 = vrot.lane.b32.xlu0 %v511, 64
    %v514 = vpop.permute.xlu0 %513
    %v516 = vmul.f32 %v499, %v514
    %518 = vrot.lane.b32.xlu0 %v516, 32
    %v519 = vpop.permute.xlu0 %518
    %521 = vst.msk [vmem:[#allocation2 + $0xa] sm:$0x3] %vm130, %v519
    %v522 = vpack.c.bf16 %v516, %v516
    %524 = vrot.lane.b32.xlu0 %v522, 32
    %v525 = vpop.permute.xlu0 %524
    %v527 = vsel %vm53, %v525, 0
    %529 = vmatprep.subr.bf16.mxu0 0
    %530 = vmatpush1.bf16.msra.mxu0 %v49
    %531 = vmatprep.subr.bf16.mxu0 0
    %532 = vmatpush1.bf16.msra.mxu0 %v50
    %533 = vmatprep.subr.bf16.mxu0 0
    %534 = vmatpush1.bf16.msra.mxu0 0
    %535 = vmatprep.subr.bf16.mxu0 0
    %536 = vmatpush1.bf16.msra.mxu0 0
    %537 = vmatprep.subr.bf16.mxu0 0
    %538 = vmatpush1.bf16.msra.mxu0 0
    %539 = vmatprep.subr.bf16.mxu0 0
    %540 = vmatpush1.bf16.msra.mxu0 0
    %541 = vmatprep.subr.bf16.mxu0 0
    %542 = vmatpush1.bf16.msra.mxu0 0
    %543 = vmatprep.subr.bf16.mxu0 0
    %544 = vmatpush1.bf16.msra.mxu0 0
    %545 = vmatprep.subr.bf16.mxu0 0
    %546 = vmatpush1.bf16.msra.mxu0 0
    %547 = vmatprep.subr.bf16.mxu0 0
    %548 = vmatpush1.bf16.msra.mxu0 0
    %549 = vmatprep.subr.bf16.mxu0 0
    %550 = vmatpush1.bf16.msra.mxu0 0
    %551 = vmatprep.subr.bf16.mxu0 0
    %552 = vmatpush1.bf16.msra.mxu0 0
    %553 = vmatprep.subr.bf16.mxu0 0
    %554 = vmatpush1.bf16.msra.mxu0 0
    %555 = vmatprep.subr.bf16.mxu0 0
    %556 = vmatpush1.bf16.msra.mxu0 0
    %557 = vmatprep.subr.bf16.mxu0 0
    %558 = vmatpush1.bf16.msra.mxu0 0
    %559 = vmatprep.subr.bf16.mxu0 0
    %560 = vmatpush1.bf16.msra.mxu0 0
    %561 = vmatprep.mubr.bf16.mxu0 0
    %562 = vmatmul.mubr.bf16.gmra.mrb[0].mxu0 %v527
    %v563 = vpop.f32.mrb[0].mxu0
    %v564 = vadd.f32 0.0, %v563
    %v565 = vpop.f32.mrb[0].mxu0
    %v566 = vpop.f32.mrb[0].mxu0
    %v567 = vpop.f32.mrb[0].mxu0
    %568 = vdwg.mxu0
    %s569 = scalar_lea.vmem %s0, 12
    %v570 = vld [vmem:[%s569] sm:$0x3]
    %v571 = vadd.f32 %v570, %v564
    %v572 = vmul.f32 %v571, 0.5
    %v573 = vsel %vm37, %v571, %v572
    %v574 = vtanh.pop %v573
    %v575 = vmul.f32 %v574, 0.5
    %v576 = vadd.f32 %v575, 0.5
    %v577 = vsel %vm37, %v574, %v576
    %v578 = vmul.f32 %v577, %v510
    %580 = vrot.lane.b32.xlu0 %v577, 64
    %v581 = vpop.permute.xlu0 %580
    %v583 = vmul.f32 %v577, %v581
    %585 = vrot.lane.b32.xlu0 %v583, 32
    %v586 = vpop.permute.xlu0 %585
    %v588 = vadd.f32 %v578, %v586
    %v589 = vtanh.pop %v588
    %591 = vrot.lane.b32.xlu0 %v589, 64
    %v592 = vpop.permute.xlu0 %591
    %v594 = vmul.f32 %v577, %v592
    %596 = vrot.lane.b32.xlu0 %v594, 32
    %v597 = vpop.permute.xlu0 %596
    %599 = vst.msk [vmem:[#allocation2 + $0xc] sm:$0x3] %vm130, %v597
    %v600 = vpack.c.bf16 %v594, %v594
    %602 = vrot.lane.b32.xlu0 %v600, 32
    %v603 = vpop.permute.xlu0 %602
    %v605 = vsel %vm53, %v603, 0
    %607 = vmatprep.subr.bf16.mxu0 0
    %608 = vmatpush1.bf16.msra.mxu0 %v49
    %609 = vmatprep.subr.bf16.mxu0 0
    %610 = vmatpush1.bf16.msra.mxu0 %v50
    %611 = vmatprep.subr.bf16.mxu0 0
    %612 = vmatpush1.bf16.msra.mxu0 0
    %613 = vmatprep.subr.bf16.mxu0 0
    %614 = vmatpush1.bf16.msra.mxu0 0
    %615 = vmatprep.subr.bf16.mxu0 0
    %616 = vmatpush1.bf16.msra.mxu0 0
    %617 = vmatprep.subr.bf16.mxu0 0
    %618 = vmatpush1.bf16.msra.mxu0 0
    %619 = vmatprep.subr.bf16.mxu0 0
    %620 = vmatpush1.bf16.msra.mxu0 0
    %621 = vmatprep.subr.bf16.mxu0 0
    %622 = vmatpush1.bf16.msra.mxu0 0
    %623 = vmatprep.subr.bf16.mxu0 0
    %624 = vmatpush1.bf16.msra.mxu0 0
    %625 = vmatprep.subr.bf16.mxu0 0
    %626 = vmatpush1.bf16.msra.mxu0 0
    %627 = vmatprep.subr.bf16.mxu0 0
    %628 = vmatpush1.bf16.msra.mxu0 0
    %629 = vmatprep.subr.bf16.mxu0 0
    %630 = vmatpush1.bf16.msra.mxu0 0
    %631 = vmatprep.subr.bf16.mxu0 0
    %632 = vmatpush1.bf16.msra.mxu0 0
    %633 = vmatprep.subr.bf16.mxu0 0
    %634 = vmatpush1.bf16.msra.mxu0 0
    %635 = vmatprep.subr.bf16.mxu0 0
    %636 = vmatpush1.bf16.msra.mxu0 0
    %637 = vmatprep.subr.bf16.mxu0 0
    %638 = vmatpush1.bf16.msra.mxu0 0
    %639 = vmatprep.mubr.bf16.mxu0 0
    %640 = vmatmul.mubr.bf16.gmra.mrb[0].mxu0 %v605
    %v641 = vpop.f32.mrb[0].mxu0
    %v642 = vadd.f32 0.0, %v641
    %v643 = vpop.f32.mrb[0].mxu0
    %v644 = vpop.f32.mrb[0].mxu0
    %v645 = vpop.f32.mrb[0].mxu0
    %646 = vdwg.mxu0
    %s647 = scalar_lea.vmem %s0, 14
    %v648 = vld [vmem:[%s647] sm:$0x3]
    %v649 = vadd.f32 %v648, %v642
    %v650 = vmul.f32 %v649, 0.5
    %v651 = vsel %vm37, %v649, %v650
    %v652 = vtanh.pop %v651
    %v653 = vmul.f32 %v652, 0.5
    %v654 = vadd.f32 %v653, 0.5
    %v655 = vsel %vm37, %v652, %v654
    %v656 = vmul.f32 %v655, %v588
    %658 = vrot.lane.b32.xlu0 %v655, 64
    %v659 = vpop.permute.xlu0 %658
    %v661 = vmul.f32 %v655, %v659
    %663 = vrot.lane.b32.xlu0 %v661, 32
    %v664 = vpop.permute.xlu0 %663
    %v666 = vadd.f32 %v656, %v664
    %v667 = vtanh.pop %v666
    %669 = vrot.lane.b32.xlu0 %v667, 64
    %v670 = vpop.permute.xlu0 %669
    %v672 = vmul.f32 %v655, %v670
    %674 = vrot.lane.b32.xlu0 %v672, 32
    %v675 = vpop.permute.xlu0 %674
    %677 = vst.msk [vmem:[#allocation2 + $0xe] sm:$0x3] %vm130, %v675
    %678 = vst.msk [vmem:[#allocation3] sm:$0x3] %vm130, %v675
    %680 = vrot.lane.b32.xlu0 %v666, 96
    %v681 = vpop.permute.xlu0 %680
    %683 = vst.msk [vmem:[#allocation5] sm:$0x3] %vm130, %v681
    %v684 = vld [vmem:[#allocation2] sm:$0xff]
    %v685 = vld [vmem:[#allocation2 + $0x8] sm:$0xff]
    %v686 = vpack.c.bf16 %v685, %v684
    %v687 = vld [vmem:[%s4] sm:$0xf]
    %v688 = vld [vmem:[%s4 + $0x4] sm:$0xf]
    %v689 = vld [vmem:[%s4 + $0x8] sm:$0xf]
    %v690 = vld [vmem:[%s4 + $0xc] sm:$0xf]
    %v691 = vld [vmem:[%s5] sm:$0x1]
    %v693 = vlaneseq
    %v694 = vshrl.u32 %v693, 7
    %v695 = vsub.s32 0, %v694
    %v696 = vrot.slane %v691, %v695
    %v702 = vunpack.c.l.b16 %v687
    %v703 = vunpack.c.l.b16 %v688
    %v704 = vunpack.c.l.b16 %v689
    %v705 = vunpack.c.l.b16 %v690
    %v706 = vpack.c.b16 %v703, %v702
    %v707 = vpack.c.b16 %v705, %v704
    %v711 = vsel %vm53, %v686, 0
    %713 = vmatprep.subr.bf16.mxu0 0
    %714 = vmatpush1.bf16.msra.mxu0 %v706
    %715 = vmatprep.subr.bf16.mxu0 0
    %716 = vmatpush1.bf16.msra.mxu0 %v707
    %717 = vmatprep.subr.bf16.mxu0 0
    %718 = vmatpush1.bf16.msra.mxu0 0
    %719 = vmatprep.subr.bf16.mxu0 0
    %720 = vmatpush1.bf16.msra.mxu0 0
    %721 = vmatprep.subr.bf16.mxu0 0
    %722 = vmatpush1.bf16.msra.mxu0 0
    %723 = vmatprep.subr.bf16.mxu0 0
    %724 = vmatpush1.bf16.msra.mxu0 0
    %725 = vmatprep.subr.bf16.mxu0 0
    %726 = vmatpush1.bf16.msra.mxu0 0
    %727 = vmatprep.subr.bf16.mxu0 0
    %728 = vmatpush1.bf16.msra.mxu0 0
    %729 = vmatprep.subr.bf16.mxu0 0
    %730 = vmatpush1.bf16.msra.mxu0 0
    %731 = vmatprep.subr.bf16.mxu0 0
    %732 = vmatpush1.bf16.msra.mxu0 0
    %733 = vmatprep.subr.bf16.mxu0 0
    %734 = vmatpush1.bf16.msra.mxu0 0
    %735 = vmatprep.subr.bf16.mxu0 0
    %736 = vmatpush1.bf16.msra.mxu0 0
    %737 = vmatprep.subr.bf16.mxu0 0
    %738 = vmatpush1.bf16.msra.mxu0 0
    %739 = vmatprep.subr.bf16.mxu0 0
    %740 = vmatpush1.bf16.msra.mxu0 0
    %741 = vmatprep.subr.bf16.mxu0 0
    %742 = vmatpush1.bf16.msra.mxu0 0
    %743 = vmatprep.subr.bf16.mxu0 0
    %744 = vmatpush1.bf16.msra.mxu0 0
    %745 = vmatprep.mubr.bf16.mxu0 0
    %746 = vmatmul.mubr.bf16.gmra.mrb[0].mxu0 %v711
    %v747 = vpop.f32.mrb[0].mxu0
    %v748 = vadd.f32 %v696, %v747
    %v749 = vpop.f32.mrb[0].mxu0
    %v750 = vpop.f32.mrb[0].mxu0
    %v751 = vadd.f32 %v696, %v750
    %v752 = vpop.f32.mrb[0].mxu0
    %753 = vdwg.mxu0
    %754 = vst [vmem:[%s6] sm:$0xff] %v748
    %755 = vst [vmem:[%s6 + $0x8] sm:$0xff] %v751
    // Predicated region
    $region26: #{char_lstm_forward.1} parent=1 // pred_check
      _
    $region27: #{char_lstm_forward.1} parent=1 // pred_check_branch
      %757 = sbr.rel (0) target = $region29
    $region28: #{char_lstm_forward.1} parent=1 // pred_region
      _
    $region29: #{char_lstm_forward.1} parent=1 // pred_fallthru
      _
    // Predicated region
    $region30: #{char_lstm_forward.1} parent=1 // pred_check
      _
    $region31: #{char_lstm_forward.1} parent=1 // pred_check_branch
      %759 = sbr.rel (0) target = $region33
    $region32: #{char_lstm_forward.1} parent=1 // pred_region
      %s761 = ssub.s32 32, 32
      %762 = vsyncadd [#allocation4], %s761
      %s764 = sshll.u32 [#allocation3], 4
      %s765 = int_to_ptr.vmem [resolvable:$true] %s764
      %767 = dma.vmem_to_hbm [thread:$0]  %s765, 32, %s7, [#allocation4]
    $region33: #{char_lstm_forward.1} parent=1 // pred_fallthru
      _
    // Predicated region
    $region34: #{char_lstm_forward.1} parent=1 // pred_check
      _
    $region35: #{char_lstm_forward.1} parent=1 // pred_check_branch
      %769 = sbr.rel (0) target = $region37
    $region36: #{char_lstm_forward.1} parent=1 // pred_region
      %s771 = ssub.s32 32, 32
      %772 = vsyncadd [#allocation6], %s771
      %s774 = sshll.u32 [#allocation5], 4
      %s775 = int_to_ptr.vmem [resolvable:$true] %s774
      %777 = dma.vmem_to_hbm [thread:$0]  %s775, 32, %s8, [#allocation6]
    $region37: #{char_lstm_forward.1} parent=1 // pred_fallthru
      _
    // Predicated region
    $region38: #{char_lstm_forward.1} parent=1 // pred_check
      _
    $region39: #{char_lstm_forward.1} parent=1 // pred_check_branch
      %779 = sbr.rel (0) target = $region41
    $region40: #{char_lstm_forward.1} parent=1 // pred_region
      _
    $region41: #{char_lstm_forward.1} parent=1 // pred_fallthru
      _
    // Predicated region
    $region42: #{char_lstm_forward.1} parent=1 // pred_check
      _
    $region43: #{char_lstm_forward.1} parent=1 // pred_check_branch
      %781 = sbr.rel (0) target = $region45
    $region44: #{char_lstm_forward.1} parent=1 // pred_region
      %782 = dma.done [#allocation4], 32
    $region45: #{char_lstm_forward.1} parent=1 // pred_fallthru
      _
    // Predicated region
    $region46: #{char_lstm_forward.1} parent=1 // pred_check
      _
    $region47: #{char_lstm_forward.1} parent=1 // pred_check_branch
      %784 = sbr.rel (0) target = $region49
    $region48: #{char_lstm_forward.1} parent=1 // pred_region
      %785 = dma.done [#allocation6], 32
    $region49: #{char_lstm_forward.1} parent=1 // pred_fallthru
      _
    %786 = vsyncpa [#allocation4], 1
    %787 = vsyncpa [#allocation6], 1

</llo_original>
